<compile_context>
chip_gen: v6e
topology: v6e:2x2x1
jax: 0.10.0
libtpu: 0.0.40
codegen_flags: <defaults>
</compile_context>

<pallas_src>
import functools

import jax
import jax.numpy as jnp
from jax.experimental import pallas as pl
from jax.experimental.pallas import tpu as pltpu

LANES = 128


def _valuenet_kernel(x_ref, a_ref, m_ref, p_ref, out_ref, *, gate_col, lanes):
    f32 = jnp.float32
    bf16 = jnp.bfloat16

    x = x_ref[...]            # (Np, 128)  bf16 node features, real cols [0:F)
    a = a_ref[...]            # (Np, Np)   bf16 normalized dense adjacency
    m = m_ref[...]            # (Bp, Np)   f32 one-hot batch mask (padded rows 0)

    # Parameter slab: 3 padded (128,128) bf16 weight blocks + 8 bias rows.
    w1 = p_ref[0 * lanes:1 * lanes, :]            # conv1 weight
    watt = p_ref[1 * lanes:2 * lanes, :]          # conv2 fused with [nn | gate]
    wo = p_ref[2 * lanes:3 * lanes, :]            # output linear
    b1 = p_ref[3 * lanes + 0:3 * lanes + 1, :]    # (1,128)
    batt = p_ref[3 * lanes + 1:3 * lanes + 2, :]
    bo = p_ref[3 * lanes + 2:3 * lanes + 3, :]

    # --- GCNConv1 + ReLU, reassociated (A @ x) @ W1 (bf16 MXU, f32 accum) ----
    ax = jnp.dot(a, x, preferred_element_type=f32)
    h1 = jnp.dot(ax.astype(bf16), w1, preferred_element_type=f32) + b1.astype(f32)
    h1 = jnp.maximum(h1, 0.0)

    # --- GCNConv2 fused with the attention projections (W2 folded host-side):
    #     att[:, :2H] = nn(conv2(h1)),  att[:, gate_col] = gate_nn(conv2(h1)).
    ah = jnp.dot(a, h1.astype(bf16), preferred_element_type=f32)
    att = (jnp.dot(ah.astype(bf16), watt, preferred_element_type=f32)
           + batt.astype(f32))                                          # (Np,128)

    # --- Segment softmax in graph-major (Bp, Np) space, f32 VPU/EUP math -----
    gate_row = att[:, gate_col:gate_col + 1].T                          # (1, Np)
    neg = f32(-1e30)
    masked = jnp.where(m > 0, gate_row, neg)                            # (Bp, Np)
    gmax = jnp.max(masked, axis=-1, keepdims=True)                      # (Bp, 1)
    e = jnp.where(m > 0, jnp.exp(masked - gmax), 0.0)                   # (Bp, Np)
    gsum = jnp.sum(e, axis=-1, keepdims=True)                           # (Bp, 1)
    num = jnp.dot(e.astype(bf16), att.astype(bf16),
                  preferred_element_type=f32)                           # (Bp,128)
    # Exact reciprocal (approx=False); max() guards empty padded graph rows.
    inv = pl.reciprocal(jnp.maximum(gsum, f32(1e-30)), approx=False)
    pooled = num * inv                                                  # (Bp,128)

    # Dropout(p=0.2) is identity in eval mode.
    # --- Output linear; lane-dense (Bp,128) store, sliced outside ------------
    out_ref[...] = (jnp.dot(pooled.astype(bf16), wo, preferred_element_type=f32)
                    + bo.astype(f32))


def _pack_params(params, lanes=LANES):
    """Pack all weights/biases into one lane-dense (3*lanes + 8, lanes) bf16 slab.

    conv2 is pre-fused into the attention projection:
      Wfused = W2 @ [Wn | Wg],  bfused = b2 @ [Wn | Wg] + [bn | bg].
    """
    f, h = params["w1"].shape
    h2 = params["wn"].shape[1]              # 2H
    out_dim = params["wo"].shape[1]
    gate_col = h2
    assert f <= lanes and h <= lanes and h2 + 1 <= lanes and out_dim <= lanes
    # Gate column of `pooled` must hit a zero (padded) row of the wo block,
    # otherwise the gate value would leak into the output head.
    assert gate_col >= params["wo"].shape[0]

    w1 = params["w1"].astype(jnp.float32)
    w2 = params["w2"].astype(jnp.float32)
    wn = params["wn"].astype(jnp.float32)
    wg = params["wg"].astype(jnp.float32)
    wo = params["wo"].astype(jnp.float32)
    b2 = params["b2"].astype(jnp.float32)

    w_fused = jnp.concatenate([w2 @ wn, w2 @ wg], axis=1)               # (H, 2H+1)
    b_fused = jnp.concatenate(
        [b2 @ wn + params["bn"].astype(jnp.float32),
         b2 @ wg + params["bg"].astype(jnp.float32)], axis=1)           # (1, 2H+1)

    def pad_block(w):
        blk = jnp.zeros((lanes, lanes), jnp.float32)
        return blk.at[: w.shape[0], : w.shape[1]].set(w)

    bias = jnp.zeros((8, lanes), jnp.float32)
    bias = bias.at[0, :h].set(params["b1"].astype(jnp.float32)[0])
    bias = bias.at[1, : h2 + 1].set(b_fused[0])
    bias = bias.at[2, :out_dim].set(params["bo"].astype(jnp.float32)[0])

    slab = jnp.concatenate(
        [pad_block(w1), pad_block(w_fused), pad_block(wo), bias], axis=0)
    return slab.astype(jnp.bfloat16), gate_col                          # (392,128)


def _round_up(v, m):
    return ((v + m - 1) // m) * m


def _pad_inputs(x, a_norm, batch_onehot):
    n, f = x.shape
    b = batch_onehot.shape[0]
    np_ = _round_up(max(n, 16), 16)          # bf16 sublane packing = 16 rows
    bp = _round_up(max(b, 8), 8)
    x_pad = jnp.zeros((np_, LANES), jnp.bfloat16).at[:n, :f].set(
        x.astype(jnp.bfloat16))
    a_pad = jnp.zeros((np_, np_), jnp.bfloat16).at[:n, :n].set(
        a_norm.astype(jnp.bfloat16))
    m_pad = jnp.zeros((bp, np_), jnp.float32).at[:b, :n].set(
        batch_onehot.astype(jnp.float32))
    return x_pad, a_pad, m_pad


def _valuenet_pallas(x3, a3, m3, slab, gate_col):
    """x3: (G, Np, 128) bf16, a3: (G, Np, Np) bf16, m3: (G, Bp, Np) f32."""
    g, np_, _ = x3.shape
    bp = m3.shape[1]
    prows = slab.shape[0]
    kernel = functools.partial(_valuenet_kernel, gate_col=gate_col, lanes=LANES)
    return pl.pallas_call(
        kernel,
        out_shape=jax.ShapeDtypeStruct((g, bp, LANES), jnp.float32),
        grid=(g,),
        in_specs=[
            pl.BlockSpec((None, np_, LANES), lambda i: (i, 0, 0)),
            pl.BlockSpec((None, np_, np_), lambda i: (i, 0, 0)),
            pl.BlockSpec((None, bp, np_), lambda i: (i, 0, 0)),
            pl.BlockSpec((prows, LANES), lambda i: (0, 0)),   # shared param slab
        ],
        out_specs=pl.BlockSpec((None, bp, LANES), lambda i: (i, 0, 0)),
        compiler_params=pltpu.CompilerParams(
            dimension_semantics=("parallel",)),   # v7x: split graph-batches over TCs
    )(x3, a3, m3, slab)


def valuenet_forward_batched(x_list, a_list, m_list, params, is_reg=False):
    """Run G independent graph-batches (same N/B per block) in ONE kernel call."""
    assert len(x_list) == len(a_list) == len(m_list)
    slab, gate_col = _pack_params(params, LANES)
    padded = [_pad_inputs(x, a, m) for x, a, m in zip(x_list, a_list, m_list)]
    x3 = jnp.stack([p[0] for p in padded])
    a3 = jnp.stack([p[1] for p in padded])
    m3 = jnp.stack([p[2] for p in padded])
    out_pad = _valuenet_pallas(x3, a3, m3, slab, gate_col)   # (G, Bp, 128) f32

    out_dim = params["wo"].shape[1]
    outs = []
    for i, m in enumerate(m_list):
        o = out_pad[i, : m.shape[0], :out_dim]
        if is_reg:
            o = jnp.clip(o[:, 0], 0.0, 1.0)
        outs.append(o)
    return outs


def valuenet_forward(x, a_norm, batch_onehot, params, is_reg=False):
    """Single graph-batch convenience wrapper (G = 1)."""
    return valuenet_forward_batched([x], [a_norm], [batch_onehot], params, is_reg)[0]


def build_norm_adjacency(edge_index, num_nodes):
    """Dense D^-1/2 (A+I) D^-1/2 from a (2, E) edge_index (symmetrized)."""
    src, dst = edge_index
    a = jnp.zeros((num_nodes, num_nodes), jnp.float32)
    a = a.at[src, dst].set(1.0)
    a = a.at[dst, src].set(1.0)                    # undirected
    a = a + jnp.eye(num_nodes, dtype=jnp.float32)  # self loops
    deg = jnp.sum(a, axis=1)
    d_inv_sqrt = jnp.where(deg > 0, 1.0 / jnp.sqrt(deg), 0.0)
    return d_inv_sqrt[:, None] * a * d_inv_sqrt[None, :]


def init_params(key, num_node_features, num_hidden_features, is_reg=False):
    h = num_hidden_features
    out_dim = 1 if is_reg else 2
    ks = jax.random.split(key, 6)
    scale = 0.1
    return {
        "w1": scale * jax.random.normal(ks[0], (num_node_features, h), jnp.float32),
        "b1": jnp.zeros((1, h), jnp.float32),
        "w2": scale * jax.random.normal(ks[1], (h, 2 * h), jnp.float32),
        "b2": jnp.zeros((1, 2 * h), jnp.float32),
        "wg": scale * jax.random.normal(ks[2], (2 * h, 1), jnp.float32),
        "bg": jnp.zeros((1, 1), jnp.float32),
        "wn": scale * jax.random.normal(ks[3], (2 * h, 2 * h), jnp.float32),
        "bn": jnp.zeros((1, 2 * h), jnp.float32),
        "wo": scale * jax.random.normal(ks[4], (2 * h, out_dim), jnp.float32),
        "bo": jnp.zeros((1, out_dim), jnp.float32),
    }


def reference_forward(x, a_norm, m, p):
    """Pure-JAX f32 reference (original, un-fused math) for correctness."""
    h = jnp.maximum(a_norm @ (x @ p["w1"]) + p["b1"], 0.0)
    h = a_norm @ (h @ p["w2"]) + p["b2"]
    gate = h @ p["wg"] + p["bg"]
    hn = h @ p["wn"] + p["bn"]
    masked = jnp.where(m > 0, gate.T, jnp.float32(-1e30))
    gmax = jnp.max(masked, axis=-1, keepdims=True)
    e = jnp.exp(gate - m.T @ gmax)
    alpha = e / (m.T @ (m @ e))
    pooled = m @ (alpha * hn)
    return pooled @ p["wo"] + p["bo"]


if __name__ == "__main__":
    # Two independent graph-batches (grid axis G=2), each with 2 graphs x 8
    # nodes (16 nodes), 4 input features, hidden = 32 (module default) so
    # 2H = 64; is_reg=False -> per-block output (2, 2).
    num_node_features = 4
    num_hidden_features = 32
    N, B = 16, 2

    key = jax.random.PRNGKey(0)
    kx0, kx1, kp = jax.random.split(key, 3)

    # Block 0: chain edges inside each graph (graph 0: nodes 0..7, graph 1: 8..15).
    src0 = jnp.array([0, 1, 2, 3, 4, 5, 6, 8, 9, 10, 11, 12, 13, 14], jnp.int32)
    edge0 = jnp.stack([src0, src0 + 1], axis=0)
    # Block 1: same chains plus a closing edge per graph (different topology).
    src1 = jnp.concatenate([src0, jnp.array([0, 8], jnp.int32)])
    dst1 = jnp.concatenate([src0 + 1, jnp.array([7, 15], jnp.int32)])
    edge1 = jnp.stack([src1, dst1], axis=0)

    batch = jnp.concatenate([jnp.zeros(8, jnp.int32), jnp.ones(8, jnp.int32)])
    batch_onehot = (batch[None, :] == jnp.arange(B)[:, None]).astype(jnp.float32)

    xs = [jax.random.normal(kx0, (N, num_node_features), jnp.float32),
          jax.random.normal(kx1, (N, num_node_features), jnp.float32)]
    a_list = [build_norm_adjacency(edge0, N), build_norm_adjacency(edge1, N)]
    m_list = [batch_onehot, batch_onehot]

    params = init_params(kp, num_node_features, num_hidden_features, is_reg=False)

    outs = valuenet_forward_batched(xs, a_list, m_list, params, is_reg=False)
    outs = jax.block_until_ready(outs)

    for x_i, a_i, o_i in zip(xs, a_list, outs):
        ref = reference_forward(x_i, a_i, batch_onehot, params)
        assert o_i.shape == (B, 2), o_i.shape
        # Tolerance covers bf16 MXU operands (f32 accumulation) + host W2 fusion.
        assert jnp.allclose(o_i, ref, atol=5e-3, rtol=5e-2), (o_i, ref)

    print("KERNEL_OK")
</pallas_src>

<mosaic_0001>
module attributes {stable_mosaic.version = 11 : i64} {
  func.func @_valuenet_kernel(%arg0: i32, %arg1: memref<1x16x128xbf16, #tpu.memory_space<vmem>>, %arg2: memref<1x16x16xbf16, #tpu.memory_space<vmem>>, %arg3: memref<1x8x16xf32, #tpu.memory_space<vmem>>, %arg4: memref<392x128xbf16, #tpu.memory_space<vmem>>, %arg5: memref<1x8x128xf32, #tpu.memory_space<vmem>>) attributes {dimension_semantics = [#tpu.dimension_semantics<parallel>], iteration_bounds = array<i64: 2>, scalar_prefetch = 0 : i64, scratch_operands = 0 : i64, tpu.core_type = #tpu.core_type<tc>, window_params = [{transform_indices = @transform_0, window_bounds = array<i64: 1, 16, 128>}, {transform_indices = @transform_1, window_bounds = array<i64: 1, 16, 16>}, {transform_indices = @transform_2, window_bounds = array<i64: 1, 8, 16>}, {pipeline_mode = #tpu.pipeline_mode<synchronous>, transform_indices = @transform_3, window_bounds = array<i64: 392, 128>}, {transform_indices = @transform_4, window_bounds = array<i64: 1, 8, 128>}]} {
    %c0 = arith.constant 0 : index
    %c0_0 = arith.constant 0 : index
    %c0_1 = arith.constant 0 : index
    %0 = vector.load %arg1[%c0, %c0_0, %c0_1] : memref<1x16x128xbf16, #tpu.memory_space<vmem>>, vector<1x16x128xbf16>
    %1 = vector.shape_cast %0 : vector<1x16x128xbf16> to vector<16x128xbf16>
    %c0_2 = arith.constant 0 : index
    %c0_3 = arith.constant 0 : index
    %c0_4 = arith.constant 0 : index
    %2 = vector.load %arg2[%c0_2, %c0_3, %c0_4] : memref<1x16x16xbf16, #tpu.memory_space<vmem>>, vector<1x16x16xbf16>
    %3 = vector.shape_cast %2 : vector<1x16x16xbf16> to vector<16x16xbf16>
    %c0_5 = arith.constant 0 : index
    %c0_6 = arith.constant 0 : index
    %c0_7 = arith.constant 0 : index
    %4 = vector.load %arg3[%c0_5, %c0_6, %c0_7] : memref<1x8x16xf32, #tpu.memory_space<vmem>>, vector<1x8x16xf32>
    %5 = vector.shape_cast %4 : vector<1x8x16xf32> to vector<8x16xf32>
    %c0_8 = arith.constant 0 : index
    %c0_9 = arith.constant 0 : index
    %6 = vector.load %arg4[%c0_8, %c0_9] : memref<392x128xbf16, #tpu.memory_space<vmem>>, vector<128x128xbf16>
    %c128 = arith.constant 128 : index
    %c0_10 = arith.constant 0 : index
    %7 = vector.load %arg4[%c128, %c0_10] : memref<392x128xbf16, #tpu.memory_space<vmem>>, vector<128x128xbf16>
    %c256 = arith.constant 256 : index
    %c0_11 = arith.constant 0 : index
    %8 = vector.load %arg4[%c256, %c0_11] : memref<392x128xbf16, #tpu.memory_space<vmem>>, vector<128x128xbf16>
    %c384 = arith.constant 384 : index
    %c0_12 = arith.constant 0 : index
    %9 = vector.load %arg4[%c384, %c0_12] : memref<392x128xbf16, #tpu.memory_space<vmem>>, vector<1x128xbf16>
    %c385 = arith.constant 385 : index
    %c0_13 = arith.constant 0 : index
    %10 = vector.load %arg4[%c385, %c0_13] : memref<392x128xbf16, #tpu.memory_space<vmem>>, vector<1x128xbf16>
    %c386 = arith.constant 386 : index
    %c0_14 = arith.constant 0 : index
    %11 = vector.load %arg4[%c386, %c0_14] : memref<392x128xbf16, #tpu.memory_space<vmem>>, vector<1x128xbf16>
    %cst = arith.constant dense<0.000000e+00> : vector<16x128xf32>
    %12 = tpu.matmul %3, %1, %cst {dimension_numbers = #tpu.dot_dimension_numbers<[1], [0], [0], [1], [0, 0, 1, 1], [], []>} : vector<16x16xbf16>, vector<16x128xbf16>, vector<16x128xf32> -> vector<16x128xf32>
    %13 = arith.truncf %12 : vector<16x128xf32> to vector<16x128xbf16>
    %cst_15 = arith.constant dense<0.000000e+00> : vector<16x128xf32>
    %14 = tpu.matmul %13, %6, %cst_15 {dimension_numbers = #tpu.dot_dimension_numbers<[1], [0], [0], [1], [0, 0, 1, 1], [], []>} : vector<16x128xbf16>, vector<128x128xbf16>, vector<16x128xf32> -> vector<16x128xf32>
    %15 = arith.extf %9 : vector<1x128xbf16> to vector<1x128xf32>
    %16 = vector.broadcast %15 : vector<1x128xf32> to vector<16x128xf32>
    %17 = arith.addf %14, %16 : vector<16x128xf32>
    %cst_16 = arith.constant 0.000000e+00 : f32
    %18 = vector.broadcast %cst_16 : f32 to vector<16x128xf32>
    %19 = arith.maximumf %17, %18 : vector<16x128xf32>
    %20 = arith.truncf %19 : vector<16x128xf32> to vector<16x128xbf16>
    %cst_17 = arith.constant dense<0.000000e+00> : vector<16x128xf32>
    %21 = tpu.matmul %3, %20, %cst_17 {dimension_numbers = #tpu.dot_dimension_numbers<[1], [0], [0], [1], [0, 0, 1, 1], [], []>} : vector<16x16xbf16>, vector<16x128xbf16>, vector<16x128xf32> -> vector<16x128xf32>
    %22 = arith.truncf %21 : vector<16x128xf32> to vector<16x128xbf16>
    %cst_18 = arith.constant dense<0.000000e+00> : vector<16x128xf32>
    %23 = tpu.matmul %22, %7, %cst_18 {dimension_numbers = #tpu.dot_dimension_numbers<[1], [0], [0], [1], [0, 0, 1, 1], [], []>} : vector<16x128xbf16>, vector<128x128xbf16>, vector<16x128xf32> -> vector<16x128xf32>
    %24 = arith.extf %10 : vector<1x128xbf16> to vector<1x128xf32>
    %25 = vector.broadcast %24 : vector<1x128xf32> to vector<16x128xf32>
    %26 = arith.addf %23, %25 : vector<16x128xf32>
    %27 = vector.extract_strided_slice %26 {offsets = [0, 64], sizes = [16, 1], strides = [1, 1]} : vector<16x128xf32> to vector<16x1xf32>
    %28 = tpu.transpose %27, [1, 0] : vector<16x1xf32> -> vector<1x16xf32>
    %cst_19 = arith.constant 0.000000e+00 : f32
    %29 = vector.broadcast %cst_19 : f32 to vector<8x16xf32>
    %30 = arith.cmpf ogt, %5, %29 : vector<8x16xf32>
    %cst_20 = arith.constant -1.000000e+30 : f32
    %31 = vector.shape_cast %28 : vector<1x16xf32> to vector<1x16xf32>
    %32 = vector.broadcast %31 : vector<1x16xf32> to vector<8x16xf32>
    %33 = vector.broadcast %cst_20 : f32 to vector<8x16xf32>
    %34 = arith.select %30, %32, %33 : vector<8x16xi1>, vector<8x16xf32>
    %cst_21 = arith.constant dense<0xFF800000> : vector<8xf32>
    %35 = vector.multi_reduction <maximumf>, %34, %cst_21 [1] : vector<8x16xf32> to vector<8xf32>
    %36 = vector.shape_cast %35 : vector<8xf32> to vector<8x1xf32>
    %cst_22 = arith.constant 0.000000e+00 : f32
    %37 = vector.broadcast %cst_22 : f32 to vector<8x16xf32>
    %38 = arith.cmpf ogt, %5, %37 : vector<8x16xf32>
    %39 = vector.broadcast %36 : vector<8x1xf32> to vector<8x16xf32>
    %40 = arith.subf %34, %39 : vector<8x16xf32>
    %41 = math.exp %40 : vector<8x16xf32>
    %cst_23 = arith.constant 0.000000e+00 : f32
    %42 = vector.broadcast %cst_23 : f32 to vector<8x16xf32>
    %43 = arith.select %38, %41, %42 : vector<8x16xi1>, vector<8x16xf32>
    %cst_24 = arith.constant dense<0.000000e+00> : vector<8xf32>
    %44 = vector.multi_reduction <add>, %43, %cst_24 [1] : vector<8x16xf32> to vector<8xf32>
    %45 = vector.shape_cast %44 : vector<8xf32> to vector<8x1xf32>
    %46 = arith.truncf %43 : vector<8x16xf32> to vector<8x16xbf16>
    %47 = arith.truncf %26 : vector<16x128xf32> to vector<16x128xbf16>
    %cst_25 = arith.constant dense<0.000000e+00> : vector<8x128xf32>
    %48 = tpu.matmul %46, %47, %cst_25 {dimension_numbers = #tpu.dot_dimension_numbers<[1], [0], [0], [1], [0, 0, 1, 1], [], []>} : vector<8x16xbf16>, vector<16x128xbf16>, vector<8x128xf32> -> vector<8x128xf32>
    %cst_26 = arith.constant 1.000000e-30 : f32
    %49 = vector.broadcast %cst_26 : f32 to vector<8x1xf32>
    %50 = arith.maximumf %45, %49 : vector<8x1xf32>
    %51 = tpu.reciprocal %50 : vector<8x1xf32> -> vector<8x1xf32>
    %52 = vector.broadcast %51 : vector<8x1xf32> to vector<8x128xf32>
    %53 = arith.mulf %48, %52 : vector<8x128xf32>
    %54 = arith.truncf %53 : vector<8x128xf32> to vector<8x128xbf16>
    %cst_27 = arith.constant dense<0.000000e+00> : vector<8x128xf32>
    %55 = tpu.matmul %54, %8, %cst_27 {dimension_numbers = #tpu.dot_dimension_numbers<[1], [0], [0], [1], [0, 0, 1, 1], [], []>} : vector<8x128xbf16>, vector<128x128xbf16>, vector<8x128xf32> -> vector<8x128xf32>
    %56 = arith.extf %11 : vector<1x128xbf16> to vector<1x128xf32>
    %57 = vector.broadcast %56 : vector<1x128xf32> to vector<8x128xf32>
    %58 = arith.addf %55, %57 : vector<8x128xf32>
    %c0_28 = arith.constant 0 : index
    %c0_29 = arith.constant 0 : index
    %c0_30 = arith.constant 0 : index
    %59 = vector.load %arg5[%c0_28, %c0_29, %c0_30] : memref<1x8x128xf32, #tpu.memory_space<vmem>>, vector<1x8x128xf32>
    %60 = vector.shape_cast %59 : vector<1x8x128xf32> to vector<8x128xf32>
    %61 = vector.shape_cast %58 : vector<8x128xf32> to vector<1x8x128xf32>
    tpu.vector_store %arg5[%c0_28, %c0_29, %c0_30], %61 {strides = array<i32>} : memref<1x8x128xf32, #tpu.memory_space<vmem>>, vector<1x8x128xf32>,
    return
  }
  func.func @transform_0(%arg0: i32) -> (i32, i32, i32) {
    %c0_i32 = arith.constant 0 : i32
    %c0_i32_0 = arith.constant 0 : i32
    %c0_i32_1 = arith.constant 0 : i32
    return %arg0, %c0_i32, %c0_i32_0 : i32, i32, i32
  }
  func.func @transform_1(%arg0: i32) -> (i32, i32, i32) {
    %c0_i32 = arith.constant 0 : i32
    %c0_i32_0 = arith.constant 0 : i32
    %c0_i32_1 = arith.constant 0 : i32
    return %arg0, %c0_i32, %c0_i32_0 : i32, i32, i32
  }
  func.func @transform_2(%arg0: i32) -> (i32, i32, i32) {
    %c0_i32 = arith.constant 0 : i32
    %c0_i32_0 = arith.constant 0 : i32
    %c0_i32_1 = arith.constant 0 : i32
    return %arg0, %c0_i32, %c0_i32_0 : i32, i32, i32
  }
  func.func @transform_3(%arg0: i32) -> (i32, i32) {
    %c0_i32 = arith.constant 0 : i32
    %c0_i32_0 = arith.constant 0 : i32
    %c0_i32_1 = arith.constant 0 : i32
    return %c0_i32, %c0_i32_0 : i32, i32
  }
  func.func @transform_4(%arg0: i32) -> (i32, i32, i32) {
    %c0_i32 = arith.constant 0 : i32
    %c0_i32_0 = arith.constant 0 : i32
    %c0_i32_1 = arith.constant 0 : i32
    return %arg0, %c0_i32, %c0_i32_0 : i32, i32, i32
  }
}

</mosaic_0001>

<llo_original>
// kernel: tpu_custom_call.1
$region0: #{tpu_custom_call.1}
  #allocation0 [shape = 'u32[]', space=smem, size = 0x4, offset = 0x4, fixed_abs, tag = 'smem constant byte address 0x4 - core index']
  #allocation1 [shape = 'u32[144,128]{1,0:T(1,128)}', space=vmem, size = 0x12000, scoped, tag = 'internal scratch']
  %s0 = inlined_call_operand.hbm [shape: bf16[2,16,128], index: 0, kind: input, shape index: {}]
  %s1 = inlined_call_operand.hbm [shape: bf16[2,16,16], index: 1, kind: input, shape index: {}]
  %s2 = inlined_call_operand.hbm [shape: f32[2,8,16], index: 2, kind: input, shape index: {}]
  %s3 = inlined_call_operand.hbm [shape: bf16[392,128], index: 3, kind: input, shape index: {}]
  %s4 = inlined_call_operand.hbm [shape: f32[2,8,128], index: 4, kind: output, shape index: {}]
  %s5 = sld [smem:[#allocation0]]
  $region65: #{tpu_custom_call.1} parent=0
    _
  %s7 = ssub.s32 1, %s5
  %s8 = scalar_select 0, %s7, %s5
  $region1: #{tpu_custom_call.1} parent=0
    #allocation2 [shape = 'u8[8192]{0}', space=vmem, size = 0x2000, scoped, tag = 'input window, operand 0']
    #allocation3 [shape = 's32[2]{0}', space=sflag, size = 0x8, scoped, tag = 'scoped memory for tpu_custom_call.1']
    #allocation4 [shape = 's32[2]{0}', space=sflag, size = 0x8, scoped, tag = 'scoped memory for tpu_custom_call.1']
    #allocation5 [shape = 'u8[8192]{0}', space=vmem, size = 0x2000, scoped, tag = 'input window, operand 1']
    #allocation6 [shape = 's32[2]{0}', space=sflag, size = 0x8, scoped, tag = 'scoped memory for tpu_custom_call.1']
    #allocation7 [shape = 'u8[8192]{0}', space=vmem, size = 0x2000, scoped, tag = 'input window, operand 2']
    #allocation8 [shape = 'u8[100352]{0}', space=vmem, size = 0x18800, scoped, tag = 'input window, operand 3, single buffered']
    #allocation9 [shape = 's32[1]{0}', space=sflag, size = 0x4, scoped, tag = 'scoped memory for tpu_custom_call.1']
    #allocation10 [shape = 'u8[8192]{0}', space=vmem, size = 0x2000, scoped, tag = 'output window, operand 0']
    %9 = vsyncpa [#allocation3], 0
    %s10 = scalar_lea.sflag [#allocation3], 1
    %11 = vsyncpa %s10, 0
    %12 = vsyncpa [#allocation6], 0
    %s13 = scalar_lea.sflag [#allocation6], 1
    %14 = vsyncpa %s13, 0
    %15 = vsyncpa [#allocation9], 0
    %16 = vsyncpa [#allocation4], 0
    %s17 = scalar_lea.sflag [#allocation4], 1
    %18 = vsyncpa %s17, 0
    loop: start=0, step=1, limit=4
    $region2: #{tpu_custom_call.1} parent=1 // loop_pre_header
      _
    $region3: #{tpu_custom_call.1} parent=1 // loop_header
      %s20 = sphi 0, %s24
      %p21 = scmp.ge.s32.totalorder %s20, 4
      %s30 = sphi 0, %s32
      %s33 = sphi 0, %s30
      %s34 = sphi 0, %s33
      %s50 = sphi 0, %s34
      %s56 = sphi 0, %s58
      %s59 = sphi 0, %s56
      %s60 = sphi 0, %s59
      %s76 = sphi 0, %s60
      %s82 = sphi 0, %s84
      %s85 = sphi 0, %s82
      %s86 = sphi 0, %s85
      %s102 = sphi 0, %s86
      %s106 = sphi 0, %s106
      %s108 = sphi 0, %s106
      %s109 = sphi 0, %s108
      %s123 = sphi 0, %s109
      %s129 = sphi 0, %s131
      %s132 = sphi 0, %s129
      %s133 = sphi 0, %s132
      %s149 = sphi 0, %s133
    $region4: #{tpu_custom_call.1} parent=1 // loop_header_branch
      %23 = sbr.rel (%p21) target = $region8
    $region5: #{tpu_custom_call.1} parent=1 // loop_body
      %s25 = ssub.s32 %s20, 1
      %s26 = ssub.s32 %s20, 2
      %s27 = sadd.s32 %s20, 1
      %s28 = ssub.s32 %s20, %s27
      %p29 = scmp.eq.s32.totalorder %s28, 0
      %s31 = sadd.s32 %s30, 1
      %s32 = scalar_select %p29, %s30, %s31
      %p35 = pneg %p29
      %p36 = scmp.eq.s32.totalorder %s20, 1
      %p37 = por %p35, %p36
      %p38 = scmp.ne.s32.totalorder %s30, %s33
      %p39 = scmp.eq.s32.totalorder %s20, 0
      %p40 = por %p38, %p39
      %p41 = scmp.ne.s32.totalorder %s30, %s33
      %p42 = scmp.eq.s32.totalorder %s25, 1
      %p43 = por %p41, %p42
      %p44 = scmp.ne.s32.totalorder %s33, %s34
      %p45 = scmp.eq.s32.totalorder %s25, 0
      %p46 = por %p44, %p45
      %p47 = scmp.ne.s32.totalorder %s33, %s34
      %p48 = scmp.eq.s32.totalorder %s26, 1
      %p49 = por %p47, %p48
      %p51 = scmp.ne.s32.totalorder %s34, %s50
      %p52 = scmp.eq.s32.totalorder %s26, 0
      %p53 = por %p51, %p52
      %s54 = ssub.s32 %s20, %s27
      %p55 = scmp.eq.s32.totalorder %s54, 0
      %s57 = sadd.s32 %s56, 1
      %s58 = scalar_select %p55, %s56, %s57
      %p61 = pneg %p55
      %p62 = scmp.eq.s32.totalorder %s20, 1
      %p63 = por %p61, %p62
      %p64 = scmp.ne.s32.totalorder %s56, %s59
      %p65 = scmp.eq.s32.totalorder %s20, 0
      %p66 = por %p64, %p65
      %p67 = scmp.ne.s32.totalorder %s56, %s59
      %p68 = scmp.eq.s32.totalorder %s25, 1
      %p69 = por %p67, %p68
      %p70 = scmp.ne.s32.totalorder %s59, %s60
      %p71 = scmp.eq.s32.totalorder %s25, 0
      %p72 = por %p70, %p71
      %p73 = scmp.ne.s32.totalorder %s59, %s60
      %p74 = scmp.eq.s32.totalorder %s26, 1
      %p75 = por %p73, %p74
      %p77 = scmp.ne.s32.totalorder %s60, %s76
      %p78 = scmp.eq.s32.totalorder %s26, 0
      %p79 = por %p77, %p78
      %s80 = ssub.s32 %s20, %s27
      %p81 = scmp.eq.s32.totalorder %s80, 0
      %s83 = sadd.s32 %s82, 1
      %s84 = scalar_select %p81, %s82, %s83
      %p87 = pneg %p81
      %p88 = scmp.eq.s32.totalorder %s20, 1
      %p89 = por %p87, %p88
      %p90 = scmp.ne.s32.totalorder %s82, %s85
      %p91 = scmp.eq.s32.totalorder %s20, 0
      %p92 = por %p90, %p91
      %p93 = scmp.ne.s32.totalorder %s82, %s85
      %p94 = scmp.eq.s32.totalorder %s25, 1
      %p95 = por %p93, %p94
      %p96 = scmp.ne.s32.totalorder %s85, %s86
      %p97 = scmp.eq.s32.totalorder %s25, 0
      %p98 = por %p96, %p97
      %p99 = scmp.ne.s32.totalorder %s85, %s86
      %p100 = scmp.eq.s32.totalorder %s26, 1
      %p101 = por %p99, %p100
      %p103 = scmp.ne.s32.totalorder %s86, %s102
      %p104 = scmp.eq.s32.totalorder %s26, 0
      %p105 = por %p103, %p104
      %s107 = sadd.s32 %s106, 1
      %p110 = scmp.eq.s32.totalorder %s20, 1
      %p111 = scmp.ne.s32.totalorder %s106, %s108
      %p112 = scmp.eq.s32.totalorder %s20, 0
      %p113 = por %p111, %p112
      %p114 = scmp.ne.s32.totalorder %s106, %s108
      %p115 = scmp.eq.s32.totalorder %s25, 1
      %p116 = por %p114, %p115
      %p117 = scmp.ne.s32.totalorder %s108, %s109
      %p118 = scmp.eq.s32.totalorder %s25, 0
      %p119 = por %p117, %p118
      %p120 = scmp.ne.s32.totalorder %s108, %s109
      %p121 = scmp.eq.s32.totalorder %s26, 1
      %p122 = por %p120, %p121
      %p124 = scmp.ne.s32.totalorder %s109, %s123
      %p125 = scmp.eq.s32.totalorder %s26, 0
      %p126 = por %p124, %p125
      %s127 = ssub.s32 %s20, %s27
      %p128 = scmp.eq.s32.totalorder %s127, 0
      %s130 = sadd.s32 %s129, 1
      %s131 = scalar_select %p128, %s129, %s130
      %p134 = pneg %p128
      %p135 = scmp.eq.s32.totalorder %s20, 1
      %p136 = por %p134, %p135
      %p137 = scmp.ne.s32.totalorder %s129, %s132
      %p138 = scmp.eq.s32.totalorder %s20, 0
      %p139 = por %p137, %p138
      %p140 = scmp.ne.s32.totalorder %s129, %s132
      %p141 = scmp.eq.s32.totalorder %s25, 1
      %p142 = por %p140, %p141
      %p143 = scmp.ne.s32.totalorder %s132, %s133
      %p144 = scmp.eq.s32.totalorder %s25, 0
      %p145 = por %p143, %p144
      %p146 = scmp.ne.s32.totalorder %s132, %s133
      %p147 = scmp.eq.s32.totalorder %s26, 1
      %p148 = por %p146, %p147
      %p150 = scmp.ne.s32.totalorder %s133, %s149
      %p151 = scmp.eq.s32.totalorder %s26, 0
      %p152 = por %p150, %p151
      %p153 = scmp.le.s32.totalorder 1, %s20
      %p154 = scmp.lt.s32.totalorder %s20, 3
      %p155 = pnand %p153, %p154
      %p156 = pneg %p155
      // Predicated region
      $region9: #{tpu_custom_call.1} parent=5 // pred_check
        _
      $region10: #{tpu_custom_call.1} parent=5 // pred_check_branch
        %158 = sbr.rel (%p155) target = $region12
      $region11: #{tpu_custom_call.1} parent=5 // pred_region
        %s159 = ssub.s32 %s20, 1
        // Predicated region
        $region13: #{tpu_custom_call.1} parent=11 // pred_check
          %p160 = pneg %p119
        $region14: #{tpu_custom_call.1} parent=11 // pred_check_branch
          %162 = sbr.rel (%p160) target = $region16
        $region15: #{tpu_custom_call.1} parent=11 // pred_region
          %s164 = ssub.s32 3136, 3136
          %165 = vsyncadd [#allocation9], %s164
          %s166 = sshll.u32 [#allocation8], 4
          %s167 = int_to_ptr.vmem [resolvable:$true] %s166
          %172 = dma.hbm_to_vmem [thread:$0]  %s3, 3136, %s167, [#allocation9], 64, 64, 4
        $region16: #{tpu_custom_call.1} parent=11 // pred_fallthru
          _
      $region12: #{tpu_custom_call.1} parent=5 // pred_fallthru
        _
      %p173 = scmp.lt.s32.totalorder %s20, 2
      // Predicated region
      $region17: #{tpu_custom_call.1} parent=5 // pred_check
        %p174 = pneg %p173
      $region18: #{tpu_custom_call.1} parent=5 // pred_check_branch
        %176 = sbr.rel (%p174) target = $region20
      $region19: #{tpu_custom_call.1} parent=5 // pred_region
        // Predicated region
        $region21: #{tpu_custom_call.1} parent=19 // pred_check
          %p177 = pneg %p40
        $region22: #{tpu_custom_call.1} parent=19 // pred_check_branch
          %179 = sbr.rel (%p177) target = $region24
        $region23: #{tpu_custom_call.1} parent=19 // pred_region
          %s180 = sand.u32 %s30, 1
          %s181 = scalar_lea.sflag [#allocation3], %s180
          %s182 = sand.u32 %s30, 1
          %s183 = smul.addr %s182, 8
          %s184 = scalar_lea.vmem [#allocation2], %s183
          %s186 = ssub.s32 128, 128
          %187 = vsyncadd %s181, %s186
          %s188 = smul.addr %s20, 2
          %s189 = smul.addr %s188, 64
          %s190 = scalar_lea.hbm %s0, %s189
          %s191 = sshll.u32 %s184, 4
          %s192 = int_to_ptr.vmem [resolvable:$true] %s191
          %197 = dma.hbm_to_vmem [thread:$0]  %s190, 128, %s192, %s181, 64, 64, 4
        $region24: #{tpu_custom_call.1} parent=19 // pred_fallthru
          _
        // Predicated region
        $region25: #{tpu_custom_call.1} parent=19 // pred_check
          %p198 = pneg %p66
        $region26: #{tpu_custom_call.1} parent=19 // pred_check_branch
          %200 = sbr.rel (%p198) target = $region28
        $region27: #{tpu_custom_call.1} parent=19 // pred_region
          %s201 = sand.u32 %s20, 1
          %s202 = scalar_lea.sflag [#allocation6], %s201
          %s203 = sand.u32 %s56, 1
          %s204 = smul.addr %s203, 8
          %s205 = scalar_lea.vmem [#allocation5], %s204
          %s207 = ssub.s32 128, 128
          %208 = vsyncadd %s202, %s207
          %s209 = smul.addr %s20, 2
          %s210 = smul.addr %s209, 64
          %s211 = scalar_lea.hbm %s1, %s210
          %s212 = sshll.u32 %s205, 4
          %s213 = int_to_ptr.vmem [resolvable:$true] %s212
          %218 = dma.hbm_to_vmem [thread:$0]  %s211, 128, %s213, %s202, 64, 64, 4
        $region28: #{tpu_custom_call.1} parent=19 // pred_fallthru
          _
        // Predicated region
        $region29: #{tpu_custom_call.1} parent=19 // pred_check
          %p219 = pneg %p92
        $region30: #{tpu_custom_call.1} parent=19 // pred_check_branch
          %221 = sbr.rel (%p219) target = $region32
        $region31: #{tpu_custom_call.1} parent=19 // pred_region
          %s222 = sand.u32 %s20, 1
          %s223 = scalar_lea.sflag [#allocation6], %s222
          %s224 = sand.u32 %s82, 1
          %s225 = smul.addr %s224, 8
          %s226 = scalar_lea.vmem [#allocation7], %s225
          %s228 = ssub.s32 128, 128
          %229 = vsyncadd %s223, %s228
          %s230 = smul.addr %s20, 128
          %s231 = scalar_lea.hbm %s2, %s230
          %s233 = sshll.u32 %s226, 4
          %s234 = int_to_ptr.vmem [resolvable:$true] %s233
          %236 = dma.hbm_to_vmem [thread:$0]  %s231, 128, %s234, %s223
        $region32: #{tpu_custom_call.1} parent=19 // pred_fallthru
          _
      $region20: #{tpu_custom_call.1} parent=5 // pred_fallthru
        _
      %p237 = scmp.le.s32.totalorder 1, %s20
      %p238 = scmp.lt.s32.totalorder %s20, 3
      %p239 = pnand %p237, %p238
      %p240 = pneg %p239
      // Predicated region
      $region33: #{tpu_custom_call.1} parent=5 // pred_check
        _
      $region34: #{tpu_custom_call.1} parent=5 // pred_check_branch
        %242 = sbr.rel (%p239) target = $region36
      $region35: #{tpu_custom_call.1} parent=5 // pred_region
        %s243 = ssub.s32 %s20, 1
        %s244 = sand.u32 %s33, 1
        %s245 = scalar_lea.sflag [#allocation3], %s244
        %s246 = sand.u32 %s33, 1
        %s247 = smul.addr %s246, 8
        %s248 = scalar_lea.vmem [#allocation2], %s247
        // Predicated region
        $region37: #{tpu_custom_call.1} parent=35 // pred_check
          %p249 = pneg %p46
        $region38: #{tpu_custom_call.1} parent=35 // pred_check_branch
          %251 = sbr.rel (%p249) target = $region40
        $region39: #{tpu_custom_call.1} parent=35 // pred_region
          %252 = dma.done %s245, 128
        $region40: #{tpu_custom_call.1} parent=35 // pred_fallthru
          _
        %s253 = sand.u32 %s25, 1
        %s254 = scalar_lea.sflag [#allocation6], %s253
        %s255 = sand.u32 %s59, 1
        %s256 = smul.addr %s255, 8
        %s257 = scalar_lea.vmem [#allocation5], %s256
        // Predicated region
        $region41: #{tpu_custom_call.1} parent=35 // pred_check
          %p258 = pneg %p72
        $region42: #{tpu_custom_call.1} parent=35 // pred_check_branch
          %260 = sbr.rel (%p258) target = $region44
        $region43: #{tpu_custom_call.1} parent=35 // pred_region
          %261 = dma.done %s254, 128
        $region44: #{tpu_custom_call.1} parent=35 // pred_fallthru
          _
        %s262 = sand.u32 %s25, 1
        %s263 = scalar_lea.sflag [#allocation6], %s262
        %s264 = sand.u32 %s85, 1
        %s265 = smul.addr %s264, 8
        %s266 = scalar_lea.vmem [#allocation7], %s265
        // Predicated region
        $region45: #{tpu_custom_call.1} parent=35 // pred_check
          %p267 = pneg %p98
        $region46: #{tpu_custom_call.1} parent=35 // pred_check_branch
          %269 = sbr.rel (%p267) target = $region48
        $region47: #{tpu_custom_call.1} parent=35 // pred_region
          %270 = dma.done %s263, 128
        $region48: #{tpu_custom_call.1} parent=35 // pred_fallthru
          _
        // Predicated region
        $region49: #{tpu_custom_call.1} parent=35 // pred_check
          %p271 = pneg %p119
        $region50: #{tpu_custom_call.1} parent=35 // pred_check_branch
          %273 = sbr.rel (%p271) target = $region52
        $region51: #{tpu_custom_call.1} parent=35 // pred_region
          %274 = dma.done [#allocation9], 3136
        $region52: #{tpu_custom_call.1} parent=35 // pred_fallthru
          _
        %s275 = sand.u32 %s33, 1
        %s276 = scalar_lea.sflag [#allocation3], %s275
        %s277 = sand.u32 %s33, 1
        %s278 = smul.addr %s277, 8
        %s279 = scalar_lea.vmem [#allocation2], %s278
        %p280 = pneg %p46
        %p281 = pneg %p43
        %s282 = sand.u32 %s25, 1
        %s283 = scalar_lea.sflag [#allocation6], %s282
        %s284 = sand.u32 %s59, 1
        %s285 = smul.addr %s284, 8
        %s286 = scalar_lea.vmem [#allocation5], %s285
        %p287 = pneg %p72
        %p288 = pneg %p69
        %s289 = sand.u32 %s25, 1
        %s290 = scalar_lea.sflag [#allocation6], %s289
        %s291 = sand.u32 %s85, 1
        %s292 = smul.addr %s291, 8
        %s293 = scalar_lea.vmem [#allocation7], %s292
        %p294 = pneg %p98
        %p295 = pneg %p95
        %p296 = pneg %p119
        %p297 = pneg %p116
        %p298 = pneg %p145
        %p299 = pneg %p142
        %s300 = sand.u32 %s132, 1
        %s301 = scalar_lea.sflag [#allocation4], %s300
        %s302 = sand.u32 %s132, 1
        %s303 = smul.addr %s302, 8
        %s304 = scalar_lea.vmem [#allocation10], %s303
        %v306 = vld [vmem:[%s248] sm:$0xf]
        %v307 = vld [vmem:[%s248 + $0x4] sm:$0xf]
        %v308 = vld [vmem:[%s257] sm:$0xf]
        %v309 = vld [vmem:[%s257 + $0x4] sm:$0xf]
        %v310 = vld [vmem:[%s266] sm:$0xff]
        %v311 = vld [vmem:[#allocation8] sm:$0xf]
        %v312 = vld [vmem:[#allocation8 + $0x4] sm:$0xf]
        %v313 = vld [vmem:[#allocation8 + $0x8] sm:$0xf]
        %v314 = vld [vmem:[#allocation8 + $0xc] sm:$0xf]
        %v315 = vld [vmem:[#allocation8 + $0x10] sm:$0xf]
        %v316 = vld [vmem:[#allocation8 + $0x14] sm:$0xf]
        %v317 = vld [vmem:[#allocation8 + $0x18] sm:$0xf]
        %v318 = vld [vmem:[#allocation8 + $0x1c] sm:$0xf]
        %v319 = vld [vmem:[#allocation8 + $0x20] sm:$0xf]
        %v320 = vld [vmem:[#allocation8 + $0x24] sm:$0xf]
        %v321 = vld [vmem:[#allocation8 + $0x28] sm:$0xf]
        %v322 = vld [vmem:[#allocation8 + $0x2c] sm:$0xf]
        %v323 = vld [vmem:[#allocation8 + $0x30] sm:$0xf]
        %v324 = vld [vmem:[#allocation8 + $0x34] sm:$0xf]
        %v325 = vld [vmem:[#allocation8 + $0x38] sm:$0xf]
        %v326 = vld [vmem:[#allocation8 + $0x3c] sm:$0xf]
        %v327 = vld [vmem:[#allocation8 + $0x40] sm:$0xf]
        %v328 = vld [vmem:[#allocation8 + $0x44] sm:$0xf]
        %v329 = vld [vmem:[#allocation8 + $0x48] sm:$0xf]
        %v330 = vld [vmem:[#allocation8 + $0x4c] sm:$0xf]
        %v331 = vld [vmem:[#allocation8 + $0x50] sm:$0xf]
        %v332 = vld [vmem:[#allocation8 + $0x54] sm:$0xf]
        %v333 = vld [vmem:[#allocation8 + $0x58] sm:$0xf]
        %v334 = vld [vmem:[#allocation8 + $0x5c] sm:$0xf]
        %v335 = vld [vmem:[#allocation8 + $0x60] sm:$0xf]
        %v336 = vld [vmem:[#allocation8 + $0x64] sm:$0xf]
        %v337 = vld [vmem:[#allocation8 + $0x68] sm:$0xf]
        %v338 = vld [vmem:[#allocation8 + $0x6c] sm:$0xf]
        %v339 = vld [vmem:[#allocation8 + $0x70] sm:$0xf]
        %v340 = vld [vmem:[#allocation8 + $0x74] sm:$0xf]
        %v341 = vld [vmem:[#allocation8 + $0x78] sm:$0xf]
        %v342 = vld [vmem:[#allocation8 + $0x7c] sm:$0xf]
        %v343 = vld [vmem:[#allocation8 + $0x80] sm:$0xf]
        %v344 = vld [vmem:[#allocation8 + $0x84] sm:$0xf]
        %v345 = vld [vmem:[#allocation8 + $0x88] sm:$0xf]
        %v346 = vld [vmem:[#allocation8 + $0x8c] sm:$0xf]
        %v347 = vld [vmem:[#allocation8 + $0x90] sm:$0xf]
        %v348 = vld [vmem:[#allocation8 + $0x94] sm:$0xf]
        %v349 = vld [vmem:[#allocation8 + $0x98] sm:$0xf]
        %v350 = vld [vmem:[#allocation8 + $0x9c] sm:$0xf]
        %v351 = vld [vmem:[#allocation8 + $0xa0] sm:$0xf]
        %v352 = vld [vmem:[#allocation8 + $0xa4] sm:$0xf]
        %v353 = vld [vmem:[#allocation8 + $0xa8] sm:$0xf]
        %v354 = vld [vmem:[#allocation8 + $0xac] sm:$0xf]
        %v355 = vld [vmem:[#allocation8 + $0xb0] sm:$0xf]
        %v356 = vld [vmem:[#allocation8 + $0xb4] sm:$0xf]
        %v357 = vld [vmem:[#allocation8 + $0xb8] sm:$0xf]
        %v358 = vld [vmem:[#allocation8 + $0xbc] sm:$0xf]
        %v359 = vld [vmem:[#allocation8 + $0xc0] sm:$0x1]
        %v360 = vld [vmem:[#allocation8 + $0xc0] sm:$0x2]
        %v363 = vunpack.c.l.b16 %v308
        %v364 = vunpack.c.l.b16 %v309
        %v365 = vpack.c.b16 %v364, %v363
        %v368 = vunpack.c.l.b16 %v306
        %v369 = vunpack.c.l.b16 %v307
        %v370 = vpack.c.b16 %v369, %v368
        %vm372 = vcmask 130048
        %v374 = vsel %vm372, %v365, 0
        %376 = vmatprep.subr.bf16.mxu0 0
        %377 = vmatpush1.bf16.msra.mxu0 0
        %378 = vmatprep.subr.bf16.mxu0 0
        %379 = vmatpush1.bf16.msra.mxu0 0
        %380 = vmatprep.subr.bf16.mxu0 0
        %381 = vmatpush1.bf16.msra.mxu0 0
        %382 = vmatprep.subr.bf16.mxu0 0
        %383 = vmatpush1.bf16.msra.mxu0 0
        %384 = vmatprep.subr.bf16.mxu0 0
        %385 = vmatpush1.bf16.msra.mxu0 0
        %386 = vmatprep.subr.bf16.mxu0 0
        %387 = vmatpush1.bf16.msra.mxu0 0
        %388 = vmatprep.subr.bf16.mxu0 0
        %389 = vmatpush1.bf16.msra.mxu0 0
        %390 = vmatprep.subr.bf16.mxu0 0
        %391 = vmatpush1.bf16.msra.mxu0 %v370
        %392 = vmatprep.subr.bf16.mxu0 0
        %393 = vmatpush2.bf16.msra.mxu0 0
        %394 = vmatprep.subr.bf16.mxu0 0
        %395 = vmatpush2.bf16.msra.mxu0 0
        %396 = vmatprep.subr.bf16.mxu0 0
        %397 = vmatpush2.bf16.msra.mxu0 0
        %398 = vmatprep.subr.bf16.mxu0 0
        %399 = vmatpush2.bf16.msra.mxu0 0
        %400 = vmatprep.subr.bf16.mxu0 0
        %401 = vmatpush2.bf16.msra.mxu0 0
        %402 = vmatprep.subr.bf16.mxu0 0
        %403 = vmatpush2.bf16.msra.mxu0 0
        %404 = vmatprep.subr.bf16.mxu0 0
        %405 = vmatpush2.bf16.msra.mxu0 0
        %406 = vmatprep.subr.bf16.mxu0 0
        %407 = vmatpush2.bf16.msra.mxu0 0
        %408 = vmatprep.mubr.bf16.mxu0 0
        %409 = vmatmul.mubr.bf16.gmra.mxu0 %v374
        %v410 = vpop.f32.mrf.mxu0
        %v411 = vadd.f32 0.0, %v410
        %v412 = vpop.f32.mrf.mxu0
        %v413 = vpop.f32.mrf.mxu0
        %v414 = vadd.f32 0.0, %v413
        %v415 = vpop.f32.mrf.mxu0
        %416 = vdwg.mxu0
        %v417 = vpack.c.bf16 %v414, %v411
        %v418 = vunpack.c.l.bf16 %v359
        %v419 = vlaneseq
        %v420 = vshrl.u32 %v419, 7
        %v421 = vsub.s32 0, %v420
        %v422 = vrot.slane %v418, %v421
        %v439 = vunpack.c.l.b16 %v311
        %v440 = vunpack.c.l.b16 %v312
        %v441 = vunpack.c.l.b16 %v313
        %v442 = vunpack.c.l.b16 %v314
        %v443 = vunpack.c.l.b16 %v315
        %v444 = vunpack.c.l.b16 %v316
        %v445 = vunpack.c.l.b16 %v317
        %v446 = vunpack.c.l.b16 %v318
        %v447 = vunpack.c.l.b16 %v319
        %v448 = vunpack.c.l.b16 %v320
        %v449 = vunpack.c.l.b16 %v321
        %v450 = vunpack.c.l.b16 %v322
        %v451 = vunpack.c.l.b16 %v323
        %v452 = vunpack.c.l.b16 %v324
        %v453 = vunpack.c.l.b16 %v325
        %v454 = vunpack.c.l.b16 %v326
        %v455 = vpack.c.b16 %v440, %v439
        %v456 = vpack.c.b16 %v442, %v441
        %v457 = vpack.c.b16 %v444, %v443
        %v458 = vpack.c.b16 %v446, %v445
        %v459 = vpack.c.b16 %v448, %v447
        %v460 = vpack.c.b16 %v450, %v449
        %v461 = vpack.c.b16 %v452, %v451
        %v462 = vpack.c.b16 %v454, %v453
        %471 = vmatprep.subr.bf16.mxu0 0
        %472 = vmatpush1.bf16.msra.mxu0 %v462
        %473 = vmatprep.subr.bf16.mxu0 0
        %474 = vmatpush1.bf16.msra.mxu0 %v461
        %475 = vmatprep.subr.bf16.mxu0 0
        %476 = vmatpush1.bf16.msra.mxu0 %v460
        %477 = vmatprep.subr.bf16.mxu0 0
        %478 = vmatpush1.bf16.msra.mxu0 %v459
        %479 = vmatprep.subr.bf16.mxu0 0
        %480 = vmatpush1.bf16.msra.mxu0 %v458
        %481 = vmatprep.subr.bf16.mxu0 0
        %482 = vmatpush1.bf16.msra.mxu0 %v457
        %483 = vmatprep.subr.bf16.mxu0 0
        %484 = vmatpush1.bf16.msra.mxu0 %v456
        %485 = vmatprep.subr.bf16.mxu0 0
        %486 = vmatpush1.bf16.msra.mxu0 %v455
        %487 = vmatprep.subr.bf16.mxu0 0
        %488 = vmatpush2.bf16.msra.mxu0 0
        %489 = vmatprep.subr.bf16.mxu0 0
        %490 = vmatpush2.bf16.msra.mxu0 0
        %491 = vmatprep.subr.bf16.mxu0 0
        %492 = vmatpush2.bf16.msra.mxu0 0
        %493 = vmatprep.subr.bf16.mxu0 0
        %494 = vmatpush2.bf16.msra.mxu0 0
        %495 = vmatprep.subr.bf16.mxu0 0
        %496 = vmatpush2.bf16.msra.mxu0 0
        %497 = vmatprep.subr.bf16.mxu0 0
        %498 = vmatpush2.bf16.msra.mxu0 0
        %499 = vmatprep.subr.bf16.mxu0 0
        %500 = vmatpush2.bf16.msra.mxu0 0
        %501 = vmatprep.subr.bf16.mxu0 0
        %502 = vmatpush2.bf16.msra.mxu0 0
        %503 = vmatprep.mubr.bf16.mxu0 0
        %504 = vmatmul.mubr.bf16.gmra.mxu0 %v417
        %v505 = vpop.f32.mrf.mxu0
        %v506 = vadd.f32 %v422, %v505
        %v507 = vpop.f32.mrf.mxu0
        %v508 = vpop.f32.mrf.mxu0
        %v509 = vadd.f32 %v422, %v508
        %v510 = vpop.f32.mrf.mxu0
        %511 = vdwg.mxu0
        %v512 = vmax.f32 %v506, 0.0
        %v513 = vmax.f32 %v509, 0.0
        %v514 = vpack.c.bf16 %v513, %v512
        %515 = vmatprep.subr.bf16.mxu0 0
        %516 = vmatpush1.bf16.msra.mxu0 0
        %517 = vmatprep.subr.bf16.mxu0 0
        %518 = vmatpush1.bf16.msra.mxu0 0
        %519 = vmatprep.subr.bf16.mxu0 0
        %520 = vmatpush1.bf16.msra.mxu0 0
        %521 = vmatprep.subr.bf16.mxu0 0
        %522 = vmatpush1.bf16.msra.mxu0 0
        %523 = vmatprep.subr.bf16.mxu0 0
        %524 = vmatpush1.bf16.msra.mxu0 0
        %525 = vmatprep.subr.bf16.mxu0 0
        %526 = vmatpush1.bf16.msra.mxu0 0
        %527 = vmatprep.subr.bf16.mxu0 0
        %528 = vmatpush1.bf16.msra.mxu0 0
        %529 = vmatprep.subr.bf16.mxu0 0
        %530 = vmatpush1.bf16.msra.mxu0 %v514
        %531 = vmatprep.subr.bf16.mxu0 0
        %532 = vmatpush2.bf16.msra.mxu0 0
        %533 = vmatprep.subr.bf16.mxu0 0
        %534 = vmatpush2.bf16.msra.mxu0 0
        %535 = vmatprep.subr.bf16.mxu0 0
        %536 = vmatpush2.bf16.msra.mxu0 0
        %537 = vmatprep.subr.bf16.mxu0 0
        %538 = vmatpush2.bf16.msra.mxu0 0
        %539 = vmatprep.subr.bf16.mxu0 0
        %540 = vmatpush2.bf16.msra.mxu0 0
        %541 = vmatprep.subr.bf16.mxu0 0
        %542 = vmatpush2.bf16.msra.mxu0 0
        %543 = vmatprep.subr.bf16.mxu0 0
        %544 = vmatpush2.bf16.msra.mxu0 0
        %545 = vmatprep.subr.bf16.mxu0 0
        %546 = vmatpush2.bf16.msra.mxu0 0
        %547 = vmatprep.mubr.bf16.mxu0 0
        %548 = vmatmul.mubr.bf16.gmra.mxu0 %v374
        %v549 = vpop.f32.mrf.mxu0
        %v550 = vadd.f32 0.0, %v549
        %v551 = vpop.f32.mrf.mxu0
        %v552 = vpop.f32.mrf.mxu0
        %v553 = vadd.f32 0.0, %v552
        %v554 = vpop.f32.mrf.mxu0
        %555 = vdwg.mxu0
        %v556 = vpack.c.bf16 %v553, %v550
        %v557 = vlaneseq
        %v558 = vshrl.u32 %v557, 7
        %v559 = vsub.s32 1, %v558
        %v560 = vrot.slane %v418, %v559
        %v577 = vunpack.c.l.b16 %v327
        %v578 = vunpack.c.l.b16 %v328
        %v579 = vunpack.c.l.b16 %v329
        %v580 = vunpack.c.l.b16 %v330
        %v581 = vunpack.c.l.b16 %v331
        %v582 = vunpack.c.l.b16 %v332
        %v583 = vunpack.c.l.b16 %v333
        %v584 = vunpack.c.l.b16 %v334
        %v585 = vunpack.c.l.b16 %v335
        %v586 = vunpack.c.l.b16 %v336
        %v587 = vunpack.c.l.b16 %v337
        %v588 = vunpack.c.l.b16 %v338
        %v589 = vunpack.c.l.b16 %v339
        %v590 = vunpack.c.l.b16 %v340
        %v591 = vunpack.c.l.b16 %v341
        %v592 = vunpack.c.l.b16 %v342
        %v593 = vpack.c.b16 %v578, %v577
        %v594 = vpack.c.b16 %v580, %v579
        %v595 = vpack.c.b16 %v582, %v581
        %v596 = vpack.c.b16 %v584, %v583
        %v597 = vpack.c.b16 %v586, %v585
        %v598 = vpack.c.b16 %v588, %v587
        %v599 = vpack.c.b16 %v590, %v589
        %v600 = vpack.c.b16 %v592, %v591
        %609 = vmatprep.subr.bf16.mxu0 0
        %610 = vmatpush1.bf16.msra.mxu0 %v600
        %611 = vmatprep.subr.bf16.mxu0 0
        %612 = vmatpush1.bf16.msra.mxu0 %v599
        %613 = vmatprep.subr.bf16.mxu0 0
        %614 = vmatpush1.bf16.msra.mxu0 %v598
        %615 = vmatprep.subr.bf16.mxu0 0
        %616 = vmatpush1.bf16.msra.mxu0 %v597
        %617 = vmatprep.subr.bf16.mxu0 0
        %618 = vmatpush1.bf16.msra.mxu0 %v596
        %619 = vmatprep.subr.bf16.mxu0 0
        %620 = vmatpush1.bf16.msra.mxu0 %v595
        %621 = vmatprep.subr.bf16.mxu0 0
        %622 = vmatpush1.bf16.msra.mxu0 %v594
        %623 = vmatprep.subr.bf16.mxu0 0
        %624 = vmatpush1.bf16.msra.mxu0 %v593
        %625 = vmatprep.subr.bf16.mxu0 0
        %626 = vmatpush2.bf16.msra.mxu0 0
        %627 = vmatprep.subr.bf16.mxu0 0
        %628 = vmatpush2.bf16.msra.mxu0 0
        %629 = vmatprep.subr.bf16.mxu0 0
        %630 = vmatpush2.bf16.msra.mxu0 0
        %631 = vmatprep.subr.bf16.mxu0 0
        %632 = vmatpush2.bf16.msra.mxu0 0
        %633 = vmatprep.subr.bf16.mxu0 0
        %634 = vmatpush2.bf16.msra.mxu0 0
        %635 = vmatprep.subr.bf16.mxu0 0
        %636 = vmatpush2.bf16.msra.mxu0 0
        %637 = vmatprep.subr.bf16.mxu0 0
        %638 = vmatpush2.bf16.msra.mxu0 0
        %639 = vmatprep.subr.bf16.mxu0 0
        %640 = vmatpush2.bf16.msra.mxu0 0
        %641 = vmatprep.mubr.bf16.mxu0 0
        %642 = vmatmul.mubr.bf16.gmra.mxu0 %v556
        %v643 = vpop.f32.mrf.mxu0
        %v644 = vadd.f32 %v560, %v643
        %v645 = vpop.f32.mrf.mxu0
        %v646 = vpop.f32.mrf.mxu0
        %v647 = vadd.f32 %v560, %v646
        %v648 = vpop.f32.mrf.mxu0
        %649 = vdwg.mxu0
        %652 = vrot.lane.b32.xlu0 %v644, 64
        %v653 = vpop.permute.xlu0 %652
        %654 = vrot.lane.b32.xlu0 %v647, 64
        %v655 = vpop.permute.xlu0 %654
        %658 = vxpose.xlu0.b32.start [1/16] %v653, 128
        %659 = vxpose.xlu0.b32.cont [2/16] %v655, 128
        %660 = vxpose.xlu0.b32.cont [3/16] 0.0, 128
        %661 = vxpose.xlu0.b32.cont [4/16] 0.0, 128
        %662 = vxpose.xlu0.b32.cont [5/16] 0.0, 128
        %663 = vxpose.xlu0.b32.cont [6/16] 0.0, 128
        %664 = vxpose.xlu0.b32.cont [7/16] 0.0, 128
        %665 = vxpose.xlu0.b32.cont [8/16] 0.0, 128
        %666 = vxpose.xlu0.b32.cont [9/16] 0.0, 128
        %667 = vxpose.xlu0.b32.cont [10/16] 0.0, 128
        %668 = vxpose.xlu0.b32.cont [11/16] 0.0, 128
        %669 = vxpose.xlu0.b32.cont [12/16] 0.0, 128
        %670 = vxpose.xlu0.b32.cont [13/16] 0.0, 128
        %671 = vxpose.xlu0.b32.cont [14/16] 0.0, 128
        %672 = vxpose.xlu0.b32.cont [15/16] 0.0, 128
        %673 = vxpose.xlu0.b32.end [16/16] 0.0, 128
        %v674 = vpop.trf.xlu0
        %v675 = vpop.trf.xlu0
        %v676 = vpop.trf.xlu0
        %v677 = vpop.trf.xlu0
        %v678 = vpop.trf.xlu0
        %v679 = vpop.trf.xlu0
        %v680 = vpop.trf.xlu0
        %v681 = vpop.trf.xlu0
        %v682 = vpop.trf.xlu0
        %v683 = vpop.trf.xlu0
        %v684 = vpop.trf.xlu0
        %v685 = vpop.trf.xlu0
        %v686 = vpop.trf.xlu0
        %v687 = vpop.trf.xlu0
        %v688 = vpop.trf.xlu0
        %v689 = vpop.trf.xlu0
        %vm690 = vcmp.gt.f32.partialorder %v310, 0.0
        %v691 = vlaneseq
        %v692 = vshrl.u32 %v691, 7
        %v693 = vsub.s32 0, %v692
        %v694 = vrot.slane %v674, %v693
        %v695 = vsel %vm690, %v694, -1e+30
        %v696 = vsel %vm372, %v695, -inf
        %697 = vmax.xlane.f32.xlu0 %v696
        %v698 = vpop.xlane.xlu0 %697
        %v699 = vsub.f32 %v695, %v698
        %v700 = vmul.f32 %v699, 1.442695
        %v701 = vpow.pop %v700
        %v702 = vsel %vm690, %v701, 0.0
        %v703 = vsel %vm372, %v702, 0.0
        %704 = vadd.xlane.f32.xlu0 %v703
        %v705 = vpop.xlane.xlu0 %704
        %v706 = vpack.c.bf16 %v702, %v702
        %v707 = vpack.c.bf16 %v647, %v644
        %v709 = vsel %vm372, %v706, 0
        %711 = vmatprep.subr.bf16.mxu0 0
        %712 = vmatpush1.bf16.msra.mxu0 0
        %713 = vmatprep.subr.bf16.mxu0 0
        %714 = vmatpush1.bf16.msra.mxu0 0
        %715 = vmatprep.subr.bf16.mxu0 0
        %716 = vmatpush1.bf16.msra.mxu0 0
        %717 = vmatprep.subr.bf16.mxu0 0
        %718 = vmatpush1.bf16.msra.mxu0 0
        %719 = vmatprep.subr.bf16.mxu0 0
        %720 = vmatpush1.bf16.msra.mxu0 0
        %721 = vmatprep.subr.bf16.mxu0 0
        %722 = vmatpush1.bf16.msra.mxu0 0
        %723 = vmatprep.subr.bf16.mxu0 0
        %724 = vmatpush1.bf16.msra.mxu0 0
        %725 = vmatprep.subr.bf16.mxu0 0
        %726 = vmatpush1.bf16.msra.mxu0 %v707
        %727 = vmatprep.subr.bf16.mxu0 0
        %728 = vmatpush2.bf16.msra.mxu0 0
        %729 = vmatprep.subr.bf16.mxu0 0
        %730 = vmatpush2.bf16.msra.mxu0 0
        %731 = vmatprep.subr.bf16.mxu0 0
        %732 = vmatpush2.bf16.msra.mxu0 0
        %733 = vmatprep.subr.bf16.mxu0 0
        %734 = vmatpush2.bf16.msra.mxu0 0
        %735 = vmatprep.subr.bf16.mxu0 0
        %736 = vmatpush2.bf16.msra.mxu0 0
        %737 = vmatprep.subr.bf16.mxu0 0
        %738 = vmatpush2.bf16.msra.mxu0 0
        %739 = vmatprep.subr.bf16.mxu0 0
        %740 = vmatpush2.bf16.msra.mxu0 0
        %741 = vmatprep.subr.bf16.mxu0 0
        %742 = vmatpush2.bf16.msra.mxu0 0
        %743 = vmatprep.mubr.bf16.mxu0 0
        %744 = vmatmul.mubr.bf16.gmra.mxu0 %v709
        %v745 = vpop.f32.mrf.mxu0
        %v746 = vadd.f32 0.0, %v745
        %v747 = vpop.f32.mrf.mxu0
        %v748 = vpop.f32.mrf.mxu0
        %v749 = vpop.f32.mrf.mxu0
        %750 = vdwg.mxu0
        %v751 = vmax.f32 %v705, 1e-30
        %v752 = vrcp.pop %v751
        %v753 = vmul.f32 %v746, %v752
        %v754 = vpack.c.bf16 %v753, %v753
        %v755 = vunpack.c.l.bf16 %v360
        %v756 = vlaneseq
        %v757 = vshrl.u32 %v756, 7
        %v758 = vsub.s32 2, %v757
        %v759 = vrot.slane %v755, %v758
        %v776 = vunpack.c.l.b16 %v343
        %v777 = vunpack.c.l.b16 %v344
        %v778 = vunpack.c.l.b16 %v345
        %v779 = vunpack.c.l.b16 %v346
        %v780 = vunpack.c.l.b16 %v347
        %v781 = vunpack.c.l.b16 %v348
        %v782 = vunpack.c.l.b16 %v349
        %v783 = vunpack.c.l.b16 %v350
        %v784 = vunpack.c.l.b16 %v351
        %v785 = vunpack.c.l.b16 %v352
        %v786 = vunpack.c.l.b16 %v353
        %v787 = vunpack.c.l.b16 %v354
        %v788 = vunpack.c.l.b16 %v355
        %v789 = vunpack.c.l.b16 %v356
        %v790 = vunpack.c.l.b16 %v357
        %v791 = vunpack.c.l.b16 %v358
        %v792 = vpack.c.b16 %v777, %v776
        %v793 = vpack.c.b16 %v779, %v778
        %v794 = vpack.c.b16 %v781, %v780
        %v795 = vpack.c.b16 %v783, %v782
        %v796 = vpack.c.b16 %v785, %v784
        %v797 = vpack.c.b16 %v787, %v786
        %v798 = vpack.c.b16 %v789, %v788
        %v799 = vpack.c.b16 %v791, %v790
        %808 = vmatprep.subr.bf16.mxu0 0
        %809 = vmatpush1.bf16.msra.mxu0 %v799
        %810 = vmatprep.subr.bf16.mxu0 0
        %811 = vmatpush1.bf16.msra.mxu0 %v798
        %812 = vmatprep.subr.bf16.mxu0 0
        %813 = vmatpush1.bf16.msra.mxu0 %v797
        %814 = vmatprep.subr.bf16.mxu0 0
        %815 = vmatpush1.bf16.msra.mxu0 %v796
        %816 = vmatprep.subr.bf16.mxu0 0
        %817 = vmatpush1.bf16.msra.mxu0 %v795
        %818 = vmatprep.subr.bf16.mxu0 0
        %819 = vmatpush1.bf16.msra.mxu0 %v794
        %820 = vmatprep.subr.bf16.mxu0 0
        %821 = vmatpush1.bf16.msra.mxu0 %v793
        %822 = vmatprep.subr.bf16.mxu0 0
        %823 = vmatpush1.bf16.msra.mxu0 %v792
        %824 = vmatprep.subr.bf16.mxu0 0
        %825 = vmatpush2.bf16.msra.mxu0 0
        %826 = vmatprep.subr.bf16.mxu0 0
        %827 = vmatpush2.bf16.msra.mxu0 0
        %828 = vmatprep.subr.bf16.mxu0 0
        %829 = vmatpush2.bf16.msra.mxu0 0
        %830 = vmatprep.subr.bf16.mxu0 0
        %831 = vmatpush2.bf16.msra.mxu0 0
        %832 = vmatprep.subr.bf16.mxu0 0
        %833 = vmatpush2.bf16.msra.mxu0 0
        %834 = vmatprep.subr.bf16.mxu0 0
        %835 = vmatpush2.bf16.msra.mxu0 0
        %836 = vmatprep.subr.bf16.mxu0 0
        %837 = vmatpush2.bf16.msra.mxu0 0
        %838 = vmatprep.subr.bf16.mxu0 0
        %839 = vmatpush2.bf16.msra.mxu0 0
        %840 = vmatprep.mubr.bf16.mxu0 0
        %841 = vmatmul.mubr.bf16.gmra.mxu0 %v754
        %v842 = vpop.f32.mrf.mxu0
        %v843 = vadd.f32 %v759, %v842
        %v844 = vpop.f32.mrf.mxu0
        %v845 = vpop.f32.mrf.mxu0
        %v846 = vpop.f32.mrf.mxu0
        %847 = vdwg.mxu0
        %848 = vst [vmem:[%s304] sm:$0xff] %v843
        %s849 = sand.u32 %s132, 1
        %s850 = scalar_lea.sflag [#allocation4], %s849
        %s851 = sand.u32 %s132, 1
        %s852 = smul.addr %s851, 8
        %s853 = scalar_lea.vmem [#allocation10], %s852
        // Predicated region
        $region53: #{tpu_custom_call.1} parent=35 // pred_check
          %p854 = pneg %p142
        $region54: #{tpu_custom_call.1} parent=35 // pred_check_branch
          %856 = sbr.rel (%p854) target = $region56
        $region55: #{tpu_custom_call.1} parent=35 // pred_region
          %s858 = ssub.s32 128, 128
          %859 = vsyncadd %s850, %s858
          %s860 = smul.addr %s25, 128
          %s861 = scalar_lea.hbm %s4, %s860
          %s863 = sshll.u32 %s853, 4
          %s864 = int_to_ptr.vmem [resolvable:$true] %s863
          %866 = dma.vmem_to_hbm [thread:$0]  %s864, 128, %s861, %s850
        $region56: #{tpu_custom_call.1} parent=35 // pred_fallthru
          _
      $region36: #{tpu_custom_call.1} parent=5 // pred_fallthru
        _
      %p867 = scmp.le.s32.totalorder 2, %s20
      // Predicated region
      $region57: #{tpu_custom_call.1} parent=5 // pred_check
        %p868 = pneg %p867
      $region58: #{tpu_custom_call.1} parent=5 // pred_check_branch
        %870 = sbr.rel (%p868) target = $region60
      $region59: #{tpu_custom_call.1} parent=5 // pred_region
        %s871 = ssub.s32 %s20, 2
        // Predicated region
        $region61: #{tpu_custom_call.1} parent=59 // pred_check
          %p872 = pneg %p148
        $region62: #{tpu_custom_call.1} parent=59 // pred_check_branch
          %874 = sbr.rel (%p872) target = $region64
        $region63: #{tpu_custom_call.1} parent=59 // pred_region
          %s875 = sand.u32 %s133, 1
          %s876 = scalar_lea.sflag [#allocation4], %s875
          %s877 = sand.u32 %s133, 1
          %s878 = smul.addr %s877, 8
          %s879 = scalar_lea.vmem [#allocation10], %s878
          %880 = dma.done %s876, 128
        $region64: #{tpu_custom_call.1} parent=59 // pred_fallthru
          _
      $region60: #{tpu_custom_call.1} parent=5 // pred_fallthru
        _
    $region6: #{tpu_custom_call.1} parent=1 // loop_footer
      %s24 = sadd.s32 1, %s20
    $region7: #{tpu_custom_call.1} parent=1 // loop_footer_branch
      %19 = sbr.rel target = $region3
    $region8: #{tpu_custom_call.1} parent=1 // loop_exit
      _
    %881 = vsyncpa [#allocation3], 1
    %s882 = scalar_lea.sflag [#allocation3], 1
    %883 = vsyncpa %s882, 1
    %884 = vsyncpa [#allocation6], 1
    %s885 = scalar_lea.sflag [#allocation6], 1
    %886 = vsyncpa %s885, 1
    %887 = vsyncpa [#allocation9], 1
    %888 = vsyncpa [#allocation4], 1
    %s889 = scalar_lea.sflag [#allocation4], 1
    %890 = vsyncpa %s889, 1

</llo_original>
